<compile_context>
chip_gen: v7x
topology: tpu7x:2x2x1
jax: 0.10.0
libtpu: 0.0.40
codegen_flags: <defaults>
</compile_context>

<pallas_src>
from functools import partial

import jax
import jax.numpy as jnp
from jax.experimental import pallas as pl
from jax.experimental.pallas import tpu as pltpu  # noqa: F401  (TPU backend)


def _mlp_kernel(x_ref, w1_ref, b1_ref, w2_ref, b2_ref, o_ref):
    # x_ref:  (B, D)        w1_ref: (D, N1)   b1_ref: (1, N1)
    # w2_ref: (N1, N2)      b2_ref: (1, N2)   o_ref:  (B, N2)
    # For the fused all-heads path N1 = K*H, N2 = K*A (W2 block-diagonal);
    # for the single-head path N1 = H, N2 = A.
    h = jnp.dot(x_ref[...], w1_ref[...], preferred_element_type=jnp.float32)
    h = h + b1_ref[...]
    h = jnp.maximum(h, 0.0)                      # ReLU on the VPU
    q = jnp.dot(h.astype(w2_ref.dtype), w2_ref[...],
                preferred_element_type=jnp.float32)
    q = q + b2_ref[...]
    o_ref[...] = q.astype(o_ref.dtype)


def _run_mlp(x, w1p, b1p, w2p, b2p):
    """Single pallas_call, no grid: whole-array VMEM blocks, 2 MXU matmuls."""
    B = x.shape[0]
    N2 = w2p.shape[1]
    return pl.pallas_call(
        _mlp_kernel,
        out_shape=jax.ShapeDtypeStruct((B, N2), x.dtype),
    )(x, w1p, b1p, w2p, b2p)


@jax.jit
def _ensemble_forward_stacked(x, w1, b1, w2, b2):
    """All K heads in one kernel invocation. Returns stacked (K, B, A)."""
    K, D, H = w1.shape
    A = w2.shape[2]
    B = x.shape[0]

    # Layer 1: pack K heads along the output (lane) dimension -> (D, K*H).
    w1p = jnp.transpose(w1, (1, 0, 2)).reshape(D, K * H)
    b1p = b1.reshape(1, K * H)

    # Layer 2: block-diagonal (K*H, K*A). Block (k,k) = W2[k]; off-diagonal
    # zeros are free — they sit inside the same MXU tile anyway.
    eye = jnp.eye(K, dtype=w2.dtype)
    w2p = jnp.einsum("kha,kj->khja", w2, eye).reshape(K * H, K * A)
    b2p = b2.reshape(1, K * A)

    out = _run_mlp(x, w1p, b1p, w2p, b2p)        # (B, K*A), lane-dense store
    return out.reshape(B, K, A).transpose(1, 0, 2)  # (K, B, A)


@partial(jax.jit, static_argnums=5)
def _single_head_forward(x, w1, b1, w2, b2, k):
    """Only head k: slice weights before the kernel -> 1/K of work and DMA."""
    return _run_mlp(x, w1[k], b1[k], w2[k], b2[k])


def ensemble_forward(x, w1, b1, w2, b2, k=None):
    """Pallas implementation of EnsembleNet.forward.

    x : (B, D) float32
    w1: (K, D, H), b1: (K, 1, H), w2: (K, H, A), b2: (K, 1, A)
    Returns a list of K (B, A) arrays if k is None (PyTorch list-of-heads
    semantics, unstacked OUTSIDE jit), else a single (B, A) array for head k.
    """
    if k is not None:
        return _single_head_forward(x, w1, b1, w2, b2, int(k))
    stacked = _ensemble_forward_stacked(x, w1, b1, w2, b2)  # (K, B, A)
    return list(stacked)  # unstack only at the outermost (non-jit) caller


def _reference(x, w1, b1, w2, b2):
    h = jnp.maximum(jnp.einsum("bd,kdh->kbh", x, w1) + b1, 0.0)
    return jnp.einsum("kbh,kha->kba", h, w2) + b2


if __name__ == "__main__":
    # Small, deterministic problem sizes (B multiple of 8 for f32 sublanes).
    K = 3      # number of ensemble heads
    B = 8      # batch
    D = 32     # input feature dim
    H = 32     # hidden dim
    A = 8      # number of actions

    key = jax.random.PRNGKey(0)
    kx, k1, k2, k3, k4 = jax.random.split(key, 5)

    x = jax.random.normal(kx, (B, D), dtype=jnp.float32)
    w1 = jax.random.normal(k1, (K, D, H), dtype=jnp.float32) * 0.1
    b1 = jax.random.normal(k2, (K, 1, H), dtype=jnp.float32) * 0.1
    w2 = jax.random.normal(k3, (K, H, A), dtype=jnp.float32) * 0.1
    b2 = jax.random.normal(k4, (K, 1, A), dtype=jnp.float32) * 0.1

    # forward() with k=None -> list of per-head Q-values (all heads, one kernel)
    outs = ensemble_forward(x, w1, b1, w2, b2, k=None)
    outs = [jax.block_until_ready(o) for o in outs]

    # forward() with an explicit head index (only that head is computed)
    out_k1 = jax.block_until_ready(ensemble_forward(x, w1, b1, w2, b2, k=1))

    # Check against pure-JAX reference.
    ref = jax.block_until_ready(_reference(x, w1, b1, w2, b2))
    for i in range(K):
        assert jnp.allclose(outs[i], ref[i], atol=1e-5, rtol=1e-5)
    assert jnp.allclose(out_k1, ref[1], atol=1e-5, rtol=1e-5)

    # TODO(synk): EnsembleNet.eval()/train() only toggle head modes (no-ops for
    # this pure-inference MLP); not represented in the kernel.
    print("KERNEL_OK")
</pallas_src>

<mosaic_0001>
module attributes {stable_mosaic.version = 11 : i64} {
  func.func @_mlp_kernel(%arg0: memref<8x32xf32, #tpu.memory_space<vmem>>, %arg1: memref<32x96xf32, #tpu.memory_space<vmem>>, %arg2: memref<1x96xf32, #tpu.memory_space<vmem>>, %arg3: memref<96x24xf32, #tpu.memory_space<vmem>>, %arg4: memref<1x24xf32, #tpu.memory_space<vmem>>, %arg5: memref<8x24xf32, #tpu.memory_space<vmem>>) attributes {dimension_semantics = [], scalar_prefetch = 0 : i64, scratch_operands = 0 : i64, tpu.core_type = #tpu.core_type<tc>} {
    %c0 = arith.constant 0 : index
    %c0_0 = arith.constant 0 : index
    %0 = vector.load %arg0[%c0, %c0_0] : memref<8x32xf32, #tpu.memory_space<vmem>>, vector<8x32xf32>
    %c0_1 = arith.constant 0 : index
    %c0_2 = arith.constant 0 : index
    %1 = vector.load %arg1[%c0_1, %c0_2] : memref<32x96xf32, #tpu.memory_space<vmem>>, vector<32x96xf32>
    %cst = arith.constant dense<0.000000e+00> : vector<8x96xf32>
    %2 = tpu.matmul %0, %1, %cst {dimension_numbers = #tpu.dot_dimension_numbers<[1], [0], [0], [1], [0, 0, 1, 1], [], []>} : vector<8x32xf32>, vector<32x96xf32>, vector<8x96xf32> -> vector<8x96xf32>
    %c0_3 = arith.constant 0 : index
    %c0_4 = arith.constant 0 : index
    %3 = vector.load %arg2[%c0_3, %c0_4] : memref<1x96xf32, #tpu.memory_space<vmem>>, vector<1x96xf32>
    %4 = vector.broadcast %3 : vector<1x96xf32> to vector<8x96xf32>
    %5 = arith.addf %2, %4 : vector<8x96xf32>
    %cst_5 = arith.constant 0.000000e+00 : f32
    %6 = vector.broadcast %cst_5 : f32 to vector<8x96xf32>
    %7 = arith.maximumf %5, %6 : vector<8x96xf32>
    %c0_6 = arith.constant 0 : index
    %c0_7 = arith.constant 0 : index
    %8 = vector.load %arg3[%c0_6, %c0_7] : memref<96x24xf32, #tpu.memory_space<vmem>>, vector<96x24xf32>
    %cst_8 = arith.constant dense<0.000000e+00> : vector<8x24xf32>
    %9 = tpu.matmul %7, %8, %cst_8 {dimension_numbers = #tpu.dot_dimension_numbers<[1], [0], [0], [1], [0, 0, 1, 1], [], []>} : vector<8x96xf32>, vector<96x24xf32>, vector<8x24xf32> -> vector<8x24xf32>
    %c0_9 = arith.constant 0 : index
    %c0_10 = arith.constant 0 : index
    %10 = vector.load %arg4[%c0_9, %c0_10] : memref<1x24xf32, #tpu.memory_space<vmem>>, vector<1x24xf32>
    %11 = vector.broadcast %10 : vector<1x24xf32> to vector<8x24xf32>
    %12 = arith.addf %9, %11 : vector<8x24xf32>
    %c0_11 = arith.constant 0 : index
    %c0_12 = arith.constant 0 : index
    %13 = vector.load %arg5[%c0_11, %c0_12] : memref<8x24xf32, #tpu.memory_space<vmem>>, vector<8x24xf32>
    tpu.vector_store %arg5[%c0_11, %c0_12], %12 {strides = array<i32>} : memref<8x24xf32, #tpu.memory_space<vmem>>, vector<8x24xf32>,
    return
  }
}

</mosaic_0001>

<llo_original>
// kernel: _ensemble_forward_stacked.1
$region0: #{_ensemble_forward_stacked.1}
  #allocation0 [shape = 'u32[]', space=smem, size = 0x4, offset = 0x4, fixed_abs, tag = 'smem constant byte address 0x4 - core index']
  #allocation1 [shape = 'u32[144,128]{1,0:T(1,128)}', space=vmem, size = 0x12000, scoped, tag = 'internal scratch']
  %s0 = inlined_call_operand.vmem [shape: f32[8,32], index: 0, kind: input, shape index: {}]
  %s1 = inlined_call_operand.vmem [shape: f32[32,96], index: 1, kind: input, shape index: {}]
  %s2 = inlined_call_operand.vmem [shape: f32[1,96], index: 2, kind: input, shape index: {}]
  %s3 = inlined_call_operand.vmem [shape: f32[96,24], index: 3, kind: input, shape index: {}]
  %s4 = inlined_call_operand.vmem [shape: f32[1,24], index: 4, kind: input, shape index: {}]
  %s5 = inlined_call_operand.vmem [shape: f32[8,24], index: 5, kind: output, shape index: {}]
  %s6 = sld [smem:[#allocation0]]
  $region30: #{_ensemble_forward_stacked.1} parent=0
    _
  %s8 = ssub.s32 1, %s6
  %s9 = scalar_select 0, %s8, %s6
  // Predicated region
  $region2: #{_ensemble_forward_stacked.1} parent=0 // pred_check
    _
  $region3: #{_ensemble_forward_stacked.1} parent=0 // pred_check_branch
    %11 = sbr.rel (0) target = $region5
  $region4: #{_ensemble_forward_stacked.1} parent=0 // pred_region
    _
  $region5: #{_ensemble_forward_stacked.1} parent=0 // pred_fallthru
    _
  // Predicated region
  $region6: #{_ensemble_forward_stacked.1} parent=0 // pred_check
    _
  $region7: #{_ensemble_forward_stacked.1} parent=0 // pred_check_branch
    %13 = sbr.rel (0) target = $region9
  $region8: #{_ensemble_forward_stacked.1} parent=0 // pred_region
    _
  $region9: #{_ensemble_forward_stacked.1} parent=0 // pred_fallthru
    _
  // Predicated region
  $region10: #{_ensemble_forward_stacked.1} parent=0 // pred_check
    _
  $region11: #{_ensemble_forward_stacked.1} parent=0 // pred_check_branch
    %15 = sbr.rel (0) target = $region13
  $region12: #{_ensemble_forward_stacked.1} parent=0 // pred_region
    _
  $region13: #{_ensemble_forward_stacked.1} parent=0 // pred_fallthru
    _
  // Predicated region
  $region14: #{_ensemble_forward_stacked.1} parent=0 // pred_check
    _
  $region15: #{_ensemble_forward_stacked.1} parent=0 // pred_check_branch
    %17 = sbr.rel (0) target = $region17
  $region16: #{_ensemble_forward_stacked.1} parent=0 // pred_region
    _
  $region17: #{_ensemble_forward_stacked.1} parent=0 // pred_fallthru
    _
  // Predicated region
  $region18: #{_ensemble_forward_stacked.1} parent=0 // pred_check
    _
  $region19: #{_ensemble_forward_stacked.1} parent=0 // pred_check_branch
    %19 = sbr.rel (0) target = $region21
  $region20: #{_ensemble_forward_stacked.1} parent=0 // pred_region
    _
  $region21: #{_ensemble_forward_stacked.1} parent=0 // pred_fallthru
    _
  %v20 = vld [vmem:[%s0] sm:$0xff]
  %v21 = vld [vmem:[%s1] sm:$0xff]
  %v22 = vld [vmem:[%s1 + $0x8] sm:$0xff]
  %v23 = vld [vmem:[%s1 + $0x10] sm:$0xff]
  %v24 = vld [vmem:[%s1 + $0x18] sm:$0xff]
  %v25 = vld [vmem:[%s2] sm:$0x1]
  %v27 = vlaneseq
  %v28 = vshrl.u32 %v27, 7
  %v29 = vsub.s32 0, %v28
  %v30 = vrot.slane %v25, %v29
  %vm32 = vcmask 261120
  %v34 = vsel %vm32, %v20, 0
  %36 = vmatprep.subr.mxu0 0.0
  %37 = vmatpush1.msra.mxu0 %v21
  %38 = vmatprep.subr.mxu0 0.0
  %39 = vmatpush1.msra.mxu0 %v22
  %40 = vmatprep.subr.mxu0 0.0
  %41 = vmatpush1.msra.mxu0 %v23
  %42 = vmatprep.subr.mxu0 0.0
  %43 = vmatpush1.msra.mxu0 %v24
  %44 = vmatprep.subr.mxu0 0.0
  %45 = vmatpush1.msra.mxu0 0.0
  %46 = vmatprep.subr.mxu0 0.0
  %47 = vmatpush1.msra.mxu0 0.0
  %48 = vmatprep.subr.mxu0 0.0
  %49 = vmatpush1.msra.mxu0 0.0
  %50 = vmatprep.subr.mxu0 0.0
  %51 = vmatpush1.msra.mxu0 0.0
  %52 = vmatprep.subr.mxu0 0.0
  %53 = vmatpush1.msra.mxu0 0.0
  %54 = vmatprep.subr.mxu0 0.0
  %55 = vmatpush1.msra.mxu0 0.0
  %56 = vmatprep.subr.mxu0 0.0
  %57 = vmatpush1.msra.mxu0 0.0
  %58 = vmatprep.subr.mxu0 0.0
  %59 = vmatpush1.msra.mxu0 0.0
  %60 = vmatprep.subr.mxu0 0.0
  %61 = vmatpush1.msra.mxu0 0.0
  %62 = vmatprep.subr.mxu0 0.0
  %63 = vmatpush1.msra.mxu0 0.0
  %64 = vmatprep.subr.mxu0 0.0
  %65 = vmatpush1.msra.mxu0 0.0
  %66 = vmatprep.subr.mxu0 0.0
  %67 = vmatpush1.msra.mxu0 0.0
  %68 = vmatprep.subr.mxu0 0.0
  %69 = vmatpush1.msra.mxu0 0.0
  %70 = vmatprep.subr.mxu0 0.0
  %71 = vmatpush1.msra.mxu0 0.0
  %72 = vmatprep.subr.mxu0 0.0
  %73 = vmatpush1.msra.mxu0 0.0
  %74 = vmatprep.subr.mxu0 0.0
  %75 = vmatpush1.msra.mxu0 0.0
  %76 = vmatprep.subr.mxu0 0.0
  %77 = vmatpush1.msra.mxu0 0.0
  %78 = vmatprep.subr.mxu0 0.0
  %79 = vmatpush1.msra.mxu0 0.0
  %80 = vmatprep.subr.mxu0 0.0
  %81 = vmatpush1.msra.mxu0 0.0
  %82 = vmatprep.subr.mxu0 0.0
  %83 = vmatpush1.msra.mxu0 0.0
  %84 = vmatprep.subr.mxu0 0.0
  %85 = vmatpush1.msra.mxu0 0.0
  %86 = vmatprep.subr.mxu0 0.0
  %87 = vmatpush1.msra.mxu0 0.0
  %88 = vmatprep.subr.mxu0 0.0
  %89 = vmatpush1.msra.mxu0 0.0
  %90 = vmatprep.subr.mxu0 0.0
  %91 = vmatpush1.msra.mxu0 0.0
  %92 = vmatprep.subr.mxu0 0.0
  %93 = vmatpush1.msra.mxu0 0.0
  %94 = vmatprep.subr.mxu0 0.0
  %95 = vmatpush1.msra.mxu0 0.0
  %96 = vmatprep.subr.mxu0 0.0
  %97 = vmatpush1.msra.mxu0 0.0
  %98 = vmatprep.subr.mxu0 0.0
  %99 = vmatpush1.msra.mxu0 0.0
  %100 = vmatprep.mubr.f32.mxu0 0.0
  %101 = vmatmul.mubr.f32.gmra.mrb[0].mxu0 %v34
  %v102 = vpop.f32.mrb[0].mxu0
  %v103 = vadd.f32 %v30, %v102
  %v104 = vpop.f32.mrb[0].mxu0
  %105 = vdwg.mxu0
  %v106 = vmax.f32 %v103, 0.0
  %v107 = vld [vmem:[%s3] sm:$0xff]
  %v108 = vld [vmem:[%s3 + $0x8] sm:$0xff]
  %v109 = vld [vmem:[%s3 + $0x10] sm:$0xff]
  %v110 = vld [vmem:[%s3 + $0x18] sm:$0xff]
  %v111 = vld [vmem:[%s3 + $0x20] sm:$0xff]
  %v112 = vld [vmem:[%s3 + $0x28] sm:$0xff]
  %v113 = vld [vmem:[%s3 + $0x30] sm:$0xff]
  %v114 = vld [vmem:[%s3 + $0x38] sm:$0xff]
  %v115 = vld [vmem:[%s3 + $0x40] sm:$0xff]
  %v116 = vld [vmem:[%s3 + $0x48] sm:$0xff]
  %v117 = vld [vmem:[%s3 + $0x50] sm:$0xff]
  %v118 = vld [vmem:[%s3 + $0x58] sm:$0xff]
  %v119 = vld [vmem:[%s4] sm:$0x1]
  %v121 = vlaneseq
  %v122 = vshrl.u32 %v121, 7
  %v123 = vsub.s32 0, %v122
  %v124 = vrot.slane %v119, %v123
  %vm126 = vcmask 785408
  %v128 = vsel %vm126, %v106, 0
  %130 = vmatprep.subr.mxu0 0.0
  %131 = vmatpush1.msra.mxu0 %v107
  %132 = vmatprep.subr.mxu0 0.0
  %133 = vmatpush1.msra.mxu0 %v108
  %134 = vmatprep.subr.mxu0 0.0
  %135 = vmatpush1.msra.mxu0 %v109
  %136 = vmatprep.subr.mxu0 0.0
  %137 = vmatpush1.msra.mxu0 %v110
  %138 = vmatprep.subr.mxu0 0.0
  %139 = vmatpush1.msra.mxu0 %v111
  %140 = vmatprep.subr.mxu0 0.0
  %141 = vmatpush1.msra.mxu0 %v112
  %142 = vmatprep.subr.mxu0 0.0
  %143 = vmatpush1.msra.mxu0 %v113
  %144 = vmatprep.subr.mxu0 0.0
  %145 = vmatpush1.msra.mxu0 %v114
  %146 = vmatprep.subr.mxu0 0.0
  %147 = vmatpush1.msra.mxu0 %v115
  %148 = vmatprep.subr.mxu0 0.0
  %149 = vmatpush1.msra.mxu0 %v116
  %150 = vmatprep.subr.mxu0 0.0
  %151 = vmatpush1.msra.mxu0 %v117
  %152 = vmatprep.subr.mxu0 0.0
  %153 = vmatpush1.msra.mxu0 %v118
  %154 = vmatprep.subr.mxu0 0.0
  %155 = vmatpush1.msra.mxu0 0.0
  %156 = vmatprep.subr.mxu0 0.0
  %157 = vmatpush1.msra.mxu0 0.0
  %158 = vmatprep.subr.mxu0 0.0
  %159 = vmatpush1.msra.mxu0 0.0
  %160 = vmatprep.subr.mxu0 0.0
  %161 = vmatpush1.msra.mxu0 0.0
  %162 = vmatprep.subr.mxu0 0.0
  %163 = vmatpush1.msra.mxu0 0.0
  %164 = vmatprep.subr.mxu0 0.0
  %165 = vmatpush1.msra.mxu0 0.0
  %166 = vmatprep.subr.mxu0 0.0
  %167 = vmatpush1.msra.mxu0 0.0
  %168 = vmatprep.subr.mxu0 0.0
  %169 = vmatpush1.msra.mxu0 0.0
  %170 = vmatprep.subr.mxu0 0.0
  %171 = vmatpush1.msra.mxu0 0.0
  %172 = vmatprep.subr.mxu0 0.0
  %173 = vmatpush1.msra.mxu0 0.0
  %174 = vmatprep.subr.mxu0 0.0
  %175 = vmatpush1.msra.mxu0 0.0
  %176 = vmatprep.subr.mxu0 0.0
  %177 = vmatpush1.msra.mxu0 0.0
  %178 = vmatprep.subr.mxu0 0.0
  %179 = vmatpush1.msra.mxu0 0.0
  %180 = vmatprep.subr.mxu0 0.0
  %181 = vmatpush1.msra.mxu0 0.0
  %182 = vmatprep.subr.mxu0 0.0
  %183 = vmatpush1.msra.mxu0 0.0
  %184 = vmatprep.subr.mxu0 0.0
  %185 = vmatpush1.msra.mxu0 0.0
  %186 = vmatprep.subr.mxu0 0.0
  %187 = vmatpush1.msra.mxu0 0.0
  %188 = vmatprep.subr.mxu0 0.0
  %189 = vmatpush1.msra.mxu0 0.0
  %190 = vmatprep.subr.mxu0 0.0
  %191 = vmatpush1.msra.mxu0 0.0
  %192 = vmatprep.subr.mxu0 0.0
  %193 = vmatpush1.msra.mxu0 0.0
  %194 = vmatprep.mubr.f32.mxu0 0.0
  %195 = vmatmul.mubr.f32.gmra.mrb[0].mxu0 %v128
  %v196 = vpop.f32.mrb[0].mxu0
  %v197 = vadd.f32 %v124, %v196
  %v198 = vpop.f32.mrb[0].mxu0
  %199 = vdwg.mxu0
  %vm200 = vcmask 195584
  %201 = vst.msk [vmem:[%s5] sm:$0xff] %vm200, %v197
  // Predicated region
  $region22: #{_ensemble_forward_stacked.1} parent=0 // pred_check
    _
  $region23: #{_ensemble_forward_stacked.1} parent=0 // pred_check_branch
    %203 = sbr.rel (0) target = $region25
  $region24: #{_ensemble_forward_stacked.1} parent=0 // pred_region
    _
  $region25: #{_ensemble_forward_stacked.1} parent=0 // pred_fallthru
    _
  // Predicated region
  $region26: #{_ensemble_forward_stacked.1} parent=0 // pred_check
    _
  $region27: #{_ensemble_forward_stacked.1} parent=0 // pred_check_branch
    %205 = sbr.rel (0) target = $region29
  $region28: #{_ensemble_forward_stacked.1} parent=0 // pred_region
    _
  $region29: #{_ensemble_forward_stacked.1} parent=0 // pred_fallthru
    _

</llo_original>
